<compile_context>
chip_gen: v5e
topology: v5e:2x2
jax: 0.10.0
libtpu: 0.0.40
codegen_flags: <defaults>
</compile_context>

<pallas_src>
import jax
import jax.numpy as jnp
from jax.experimental import pallas as pl
from jax.experimental.pallas import tpu as pltpu

_LANES = 128


def _hinge_kernel(x_ref, o_ref):
    x = x_ref[...]
    one = jnp.asarray(1.0, dtype=x.dtype)
    zero = jnp.asarray(0.0, dtype=x.dtype)
    h = jnp.maximum(one - x, zero)          # VPU max
    o_ref[...] = (0.5 * h * h).astype(o_ref.dtype)


def _hinge_jnp(x):
    """Same expression in plain jnp (used only for the <128-element tail)."""
    h = jnp.maximum(jnp.asarray(1.0, x.dtype) - x, jnp.asarray(0.0, x.dtype))
    return (0.5 * h * h).astype(x.dtype)


def _round_up(x, m):
    return ((x + m - 1) // m) * m


def _vmem_capacity_bytes():
    """Generation-aware VMEM size; conservative fallback if the query fails."""
    try:
        return int(pltpu.get_tpu_info().vmem_capacity_bytes)
    except Exception:
        return 64 << 20  # v7x per-TensorCore size (most restrictive)


def _hinge_2d(x2d):
    """Run the streaming kernel on a (rows, 128) lane-dense slab."""
    rows, lanes = x2d.shape
    dtype = x2d.dtype
    itemsize = jnp.dtype(dtype).itemsize
    pack = max(8, 32 // itemsize)  # native sublane packing: 8 f32 / 16 bf16 / 32 int8

    vmem_cap = _vmem_capacity_bytes()
    # Input + output, each double-buffered => 4 * block_bytes. Budget ~half VMEM.
    block_budget = vmem_cap // 8
    max_tile_rows = max(pack, (block_budget // (lanes * itemsize)) // pack * pack)

    n_steps = pl.cdiv(rows, max_tile_rows)
    if rows < 64:
        # Tiny input: per-step overhead dominates, keep a single step.
        n_steps = 1
    elif n_steps <= 4:
        # Balance across v7x's two TensorCores (grid axis is "parallel"):
        # even step count, ideally 4 so each core gets >=2 steps and output
        # writeback overlaps the next input fetch.
        n_steps = 4 if rows >= 256 else 2

    tr = min(_round_up(pl.cdiv(rows, n_steps), pack), _round_up(rows, pack))
    if rows < pack:
        tr = rows  # block == full dim (always legal)
    grid = (pl.cdiv(rows, tr),)

    block_bytes = tr * lanes * itemsize
    vmem_limit = max(
        min(4 * block_bytes + (8 << 20), int(vmem_cap * 0.85)),
        16 << 20,
    )

    return pl.pallas_call(
        _hinge_kernel,
        out_shape=jax.ShapeDtypeStruct((rows, lanes), dtype),
        grid_spec=pltpu.PrefetchScalarGridSpec(
            num_scalar_prefetch=0,
            grid=grid,
            in_specs=[pl.BlockSpec((tr, lanes), lambda i: (i, 0))],
            out_specs=pl.BlockSpec((tr, lanes), lambda i: (i, 0)),
        ),
        compiler_params=pltpu.CompilerParams(
            dimension_semantics=("parallel",),
            vmem_limit_bytes=vmem_limit,
        ),
    )(x2d)


@jax.jit
def hinge_loss(out: jax.Array) -> jax.Array:
    """Elementwise hinge loss: 0.5 * max(1 - out, 0)**2."""
    orig_shape = out.shape
    x = out
    if not jnp.issubdtype(x.dtype, jnp.floating):
        # Match PyTorch: 0.5 * (integer)**2 promotes to float.
        x = x.astype(jnp.float32)

    total = x.size
    if total == 0:
        return jnp.zeros(orig_shape, x.dtype)

    flat = x.reshape(-1)
    aligned = (total // _LANES) * _LANES
    tail_len = total - aligned

    if aligned == 0:
        # Fewer than 128 elements: a kernel launch is not worth it.
        return _hinge_jnp(flat).reshape(orig_shape)

    main = flat[:aligned].reshape(aligned // _LANES, _LANES)
    main_res = _hinge_2d(main).reshape(-1)

    if tail_len:
        tail_res = _hinge_jnp(flat[aligned:])
        flat_res = jnp.concatenate([main_res, tail_res])
    else:
        flat_res = main_res
    return flat_res.reshape(orig_shape)


if __name__ == "__main__":
    key = jax.random.PRNGKey(0)

    # Main case: NCHW-like scores, multiple of 128 elements -> pure kernel path.
    x = jax.random.normal(key, (2, 4, 16, 16), dtype=jnp.float32)
    y = jax.block_until_ready(hinge_loss(x))
    y_ref = 0.5 * jnp.maximum(1.0 - x, 0.0) ** 2
    assert y.shape == x.shape and y.dtype == x.dtype
    assert jnp.allclose(y, y_ref, atol=1e-6, rtol=1e-6)

    # Unaligned size > 128: kernel on the aligned prefix + jnp tail.
    x2 = jax.random.normal(jax.random.PRNGKey(1), (5, 53), dtype=jnp.float32)
    y2 = jax.block_until_ready(hinge_loss(x2))
    y2_ref = 0.5 * jnp.maximum(1.0 - x2, 0.0) ** 2
    assert jnp.allclose(y2, y2_ref, atol=1e-6, rtol=1e-6)

    # Tiny (<128 elements): jnp fallback path.
    x3 = jax.random.normal(jax.random.PRNGKey(2), (3, 5, 7), dtype=jnp.float32)
    y3 = jax.block_until_ready(hinge_loss(x3))
    y3_ref = 0.5 * jnp.maximum(1.0 - x3, 0.0) ** 2
    assert jnp.allclose(y3, y3_ref, atol=1e-6, rtol=1e-6)

    print("KERNEL_OK")
</pallas_src>

<mosaic_0001>
module attributes {stable_mosaic.version = 11 : i64} {
  func.func @_hinge_kernel(%arg0: i32, %arg1: memref<16x128xf32, #tpu.memory_space<vmem>>, %arg2: memref<16x128xf32, #tpu.memory_space<vmem>>) attributes {dimension_semantics = [#tpu.dimension_semantics<parallel>], iteration_bounds = array<i64: 1>, scalar_prefetch = 0 : i64, scratch_operands = 0 : i64, tpu.core_type = #tpu.core_type<tc>, window_params = [{transform_indices = @transform_0, window_bounds = array<i64: 16, 128>}, {transform_indices = @transform_1, window_bounds = array<i64: 16, 128>}]} {
    %c0 = arith.constant 0 : index
    %c0_0 = arith.constant 0 : index
    %0 = vector.load %arg1[%c0, %c0_0] : memref<16x128xf32, #tpu.memory_space<vmem>>, vector<16x128xf32>
    %cst = arith.constant 1.000000e+00 : f32
    %1 = vector.broadcast %cst : f32 to vector<16x128xf32>
    %2 = arith.subf %1, %0 : vector<16x128xf32>
    %cst_1 = arith.constant 0.000000e+00 : f32
    %3 = vector.broadcast %cst_1 : f32 to vector<16x128xf32>
    %4 = arith.maximumf %2, %3 : vector<16x128xf32>
    %cst_2 = arith.constant 5.000000e-01 : f32
    %5 = vector.broadcast %cst_2 : f32 to vector<16x128xf32>
    %6 = arith.mulf %5, %4 : vector<16x128xf32>
    %7 = arith.mulf %6, %4 : vector<16x128xf32>
    %c0_3 = arith.constant 0 : index
    %c0_4 = arith.constant 0 : index
    %8 = vector.load %arg2[%c0_3, %c0_4] : memref<16x128xf32, #tpu.memory_space<vmem>>, vector<16x128xf32>
    tpu.vector_store %arg2[%c0_3, %c0_4], %7 {strides = array<i32>} : memref<16x128xf32, #tpu.memory_space<vmem>>, vector<16x128xf32>,
    return
  }
  func.func @transform_0(%arg0: i32) -> (i32, i32) {
    %c0_i32 = arith.constant 0 : i32
    %c0_i32_0 = arith.constant 0 : i32
    return %arg0, %c0_i32 : i32, i32
  }
  func.func @transform_1(%arg0: i32) -> (i32, i32) {
    %c0_i32 = arith.constant 0 : i32
    %c0_i32_0 = arith.constant 0 : i32
    return %arg0, %c0_i32 : i32, i32
  }
}

</mosaic_0001>

<llo_original>
// kernel: hinge_loss.1
$region0: #{hinge_loss.1}
  #allocation0 [shape = 'u32[]', space=smem, size = 0x4, offset = 0x4, fixed_abs, tag = 'smem constant byte address 0x4 - core index']
  #allocation1 [shape = 'u32[72,128]{1,0:T(1,128)}', space=vmem, size = 0x9000, scoped, tag = 'internal scratch']
  %s0 = inlined_call_operand.vmem [shape: f32[16,128], index: 0, kind: input, shape index: {}]
  %s1 = inlined_call_operand.vmem [shape: f32[16,128], index: 1, kind: output, shape index: {}]
  %s2 = sld [smem:[#allocation0]]
  $region14: #{hinge_loss.1} parent=0
    _
  %s4 = ssub.s32 1, %s2
  %s5 = scalar_select 0, %s4, %s2
  // Predicated region
  $region2: #{hinge_loss.1} parent=0 // pred_check
    _
  $region3: #{hinge_loss.1} parent=0 // pred_check_branch
    %7 = sbr.rel (0) target = $region5
  $region4: #{hinge_loss.1} parent=0 // pred_region
    _
  $region5: #{hinge_loss.1} parent=0 // pred_fallthru
    _
  %v8 = vld [vmem:[%s0] sm:$0xff]
  %v9 = vld [vmem:[%s0 + $0x8] sm:$0xff]
  %v10 = vsub.f32 1.0, %v8
  %v11 = vsub.f32 1.0, %v9
  %v12 = vmax.f32 %v10, 0.0
  %v13 = vmax.f32 %v11, 0.0
  %v14 = vmul.f32 %v12, 0.5
  %v15 = vmul.f32 %v13, 0.5
  %v16 = vmul.f32 %v14, %v12
  %v17 = vmul.f32 %v15, %v13
  %18 = vst [vmem:[%s1] sm:$0xff] %v16
  %19 = vst [vmem:[%s1 + $0x8] sm:$0xff] %v17
  // Predicated region
  $region6: #{hinge_loss.1} parent=0 // pred_check
    _
  $region7: #{hinge_loss.1} parent=0 // pred_check_branch
    %21 = sbr.rel (0) target = $region9
  $region8: #{hinge_loss.1} parent=0 // pred_region
    _
  $region9: #{hinge_loss.1} parent=0 // pred_fallthru
    _
  // Predicated region
  $region10: #{hinge_loss.1} parent=0 // pred_check
    _
  $region11: #{hinge_loss.1} parent=0 // pred_check_branch
    %23 = sbr.rel (0) target = $region13
  $region12: #{hinge_loss.1} parent=0 // pred_region
    _
  $region13: #{hinge_loss.1} parent=0 // pred_fallthru
    _

</llo_original>
